<compile_context>
chip_gen: v7x
topology: tpu7x:2x2x1
jax: 0.10.0
libtpu: 0.0.40
codegen_flags: <defaults>
</compile_context>

<pallas_src>
import jax
import jax.numpy as jnp
from jax.experimental import pallas as pl
from jax.experimental.pallas import tpu as pltpu

HIDDEN = 32
VOCAB = 16
SEQ_LEN = 8


# ----------------------------------------------------------------------------
# Phase 1: embedding gather + input projection (independent per token).
# ----------------------------------------------------------------------------
def input_proj_kernel(toks_ref,     # scalar prefetch: (S,) int32 in SMEM
                      emb_row_ref,  # (1, 1, H)  gathered embedding row for token t
                      w_ihT_ref,    # (H, 3H)    W_ih^T (resident)
                      b_ih_ref,     # (1, 3H)    b_ih, f32 (resident)
                      gi_ref):      # (1, 1, 3H) out: input-side gate pre-activations
    x = emb_row_ref[0]                                         # (1, H) MXU dtype
    gi = jnp.dot(x, w_ihT_ref[...],
                 preferred_element_type=jnp.float32) + b_ih_ref[...]
    gi_ref[0] = gi


# ----------------------------------------------------------------------------
# Phase 2: sequential GRU recurrence (hidden state carried in VMEM scratch).
# ----------------------------------------------------------------------------
def gru_recurrence_kernel(gi_ref,     # (1, 1, 3H) precomputed input-side gates, f32
                          h0_ref,     # (1, H)     initial hidden (resident)
                          w_hhT_ref,  # (H, 3H)    W_hh^T (resident)
                          b_hh_ref,   # (1, 3H)    b_hh, f32 (resident)
                          out_ref,    # (1, 1, H)  output row for step t
                          h_scratch): # VMEM (1, H) f32: running hidden state
    H = h0_ref.shape[1]
    t = pl.program_id(0)

    @pl.when(t == 0)
    def _():
        h_scratch[...] = h0_ref[...]

    h = h_scratch[...]                                          # (1, H) f32
    gh = jnp.dot(h.astype(w_hhT_ref.dtype), w_hhT_ref[...],
                 preferred_element_type=jnp.float32) + b_hh_ref[...]
    gi = gi_ref[0]                                              # (1, 3H) f32

    # Gate math stays in f32 (v5e has no bf16 VPU/EUP).
    rz = jax.nn.sigmoid(gi[:, :2 * H] + gh[:, :2 * H])
    r, z = rz[:, :H], rz[:, H:]
    n = jnp.tanh(gi[:, 2 * H:] + r * gh[:, 2 * H:])
    h_new = n + z * (h - n)                                     # == (1-z)*n + z*h

    h_scratch[...] = h_new
    out_ref[0] = h_new.astype(out_ref.dtype)


# ----------------------------------------------------------------------------
# One-time parameter prep (hoisted out of the per-call path).
# ----------------------------------------------------------------------------
def prepare_params(params, mxu_dtype=jnp.bfloat16):
    """Returns (emb3, w_ihT, w_hhT, b_ih, b_hh) laid out for the kernels.

    emb3  (VOCAB, 1, H): one embedding row per block (gathered via scalar-prefetch
                         index_map; the table never has to be fully VMEM-resident).
    w_ihT (H, 3H), w_hhT (H, 3H): pre-transposed GRU weights in the MXU dtype.
    b_ih, b_hh (1, 3H): biases kept f32 (added after f32 accumulation).
    """
    emb, w_ih, w_hh, b_ih, b_hh = params
    three_h, H = w_ih.shape
    emb3 = emb.reshape(emb.shape[0], 1, H).astype(mxu_dtype)
    w_ihT = w_ih.T.astype(mxu_dtype)
    w_hhT = w_hh.T.astype(mxu_dtype)
    b_ih2 = b_ih.reshape(1, three_h).astype(jnp.float32)
    b_hh2 = b_hh.reshape(1, three_h).astype(jnp.float32)
    return emb3, w_ihT, w_hhT, b_ih2, b_hh2


def encoder_rnn_encode(tokens, hidden, prep):
    """Run the whole token sequence through the encoder.

    tokens: (S,) int32; hidden: (1, 1, H) f32.
    Returns (outputs (S, 1, H) f32, final hidden (1, 1, H) f32) — the same values
    PyTorch's EncoderRNN.forward produces when called once per token.
    """
    emb3, w_ihT, w_hhT, b_ih, b_hh = prep
    S = tokens.shape[0]
    H = hidden.shape[-1]
    G = w_ihT.shape[1]                       # 3H
    h0 = hidden.reshape(1, H).astype(jnp.float32)
    toks = tokens.astype(jnp.int32)

    # Phase 1: gi[t] = emb[tok_t] @ W_ih^T + b_ih, independent per token.
    gi_all = pl.pallas_call(
        input_proj_kernel,
        out_shape=jax.ShapeDtypeStruct((S, 1, G), jnp.float32),
        grid_spec=pltpu.PrefetchScalarGridSpec(
            num_scalar_prefetch=1,
            grid=(S,),
            in_specs=[
                # Only embedding row toks[t] is DMA'd each step.
                pl.BlockSpec((1, 1, H), lambda t, toks: (toks[t], 0, 0)),
                pl.BlockSpec(w_ihT.shape, lambda t, toks: (0, 0)),   # resident
                pl.BlockSpec(b_ih.shape, lambda t, toks: (0, 0)),    # resident
            ],
            out_specs=pl.BlockSpec((1, 1, G), lambda t, toks: (t, 0, 0)),
        ),
        compiler_params=pltpu.CompilerParams(
            dimension_semantics=("parallel",),
        ),
    )(toks, emb3, w_ihT, b_ih)

    # Phase 2: sequential recurrence; hidden carried via VMEM scratch.
    out = pl.pallas_call(
        gru_recurrence_kernel,
        out_shape=jax.ShapeDtypeStruct((S, 1, H), jnp.float32),
        grid_spec=pltpu.PrefetchScalarGridSpec(
            num_scalar_prefetch=0,
            grid=(S,),
            in_specs=[
                pl.BlockSpec((1, 1, G), lambda t: (t, 0, 0)),
                pl.BlockSpec((1, H), lambda t: (0, 0)),              # h0, resident
                pl.BlockSpec(w_hhT.shape, lambda t: (0, 0)),         # resident
                pl.BlockSpec(b_hh.shape, lambda t: (0, 0)),          # resident
            ],
            out_specs=pl.BlockSpec((1, 1, H), lambda t: (t, 0, 0)),
            scratch_shapes=[pltpu.VMEM((1, H), jnp.float32)],
        ),
        compiler_params=pltpu.CompilerParams(
            # Sequential hidden-state carry through scratch -> "arbitrary".
            dimension_semantics=("arbitrary",),
        ),
    )(gi_all, h0, w_hhT, b_hh)

    return out, out[-1].reshape(1, 1, H)


def encoder_rnn_forward(token, hidden, prep):
    """Single-step API matching EncoderRNN.forward(input, hidden)."""
    out, h_new = encoder_rnn_encode(token.reshape(1), hidden, prep)
    return out.reshape(1, 1, -1), h_new


def init_params(key, vocab, hidden):
    """Deterministic synthetic parameters matching nn.Embedding + nn.GRU shapes."""
    k0, k1, k2, k3, k4 = jax.random.split(key, 5)
    bound = 1.0 / jnp.sqrt(hidden)
    emb = jax.random.normal(k0, (vocab, hidden), dtype=jnp.float32)
    w_ih = jax.random.uniform(k1, (3 * hidden, hidden), jnp.float32, -bound, bound)
    w_hh = jax.random.uniform(k2, (3 * hidden, hidden), jnp.float32, -bound, bound)
    b_ih = jax.random.uniform(k3, (3 * hidden,), jnp.float32, -bound, bound)
    b_hh = jax.random.uniform(k4, (3 * hidden,), jnp.float32, -bound, bound)
    return emb, w_ih, w_hh, b_ih, b_hh


def reference_encode(tokens, hidden, params):
    """Pure-JAX f32 reference of the PyTorch forward, applied per token."""
    emb, w_ih, w_hh, b_ih, b_hh = params
    H = hidden.shape[-1]
    h = hidden.reshape(1, H)
    outs = []
    for t in range(tokens.shape[0]):
        x = emb[tokens[t]].reshape(1, H)
        gi = x @ w_ih.T + b_ih
        gh = h @ w_hh.T + b_hh
        i_r, i_z, i_n = gi[:, :H], gi[:, H:2 * H], gi[:, 2 * H:]
        h_r, h_z, h_n = gh[:, :H], gh[:, H:2 * H], gh[:, 2 * H:]
        r = jax.nn.sigmoid(i_r + h_r)
        z = jax.nn.sigmoid(i_z + h_z)
        n = jnp.tanh(i_n + r * h_n)
        h = (1.0 - z) * n + z * h
        outs.append(h)
    return jnp.stack(outs, axis=0), h.reshape(1, 1, H)


if __name__ == "__main__":
    key = jax.random.PRNGKey(0)
    pkey, tkey = jax.random.split(key)
    params = init_params(pkey, VOCAB, HIDDEN)

    tokens = jax.random.randint(tkey, (SEQ_LEN,), 0, VOCAB, dtype=jnp.int32)
    hidden0 = jnp.zeros((1, 1, HIDDEN), dtype=jnp.float32)   # initHidden()

    ref_out, ref_hid = reference_encode(tokens, hidden0, params)

    # Exact path: f32 MXU operands, matching PyTorch GRU semantics.
    prep_f32 = prepare_params(params, mxu_dtype=jnp.float32)
    out_f32, hid_f32 = encoder_rnn_encode(tokens, hidden0, prep_f32)
    jax.block_until_ready((out_f32, hid_f32))
    assert out_f32.shape == (SEQ_LEN, 1, HIDDEN) and hid_f32.shape == (1, 1, HIDDEN)
    assert jnp.allclose(out_f32, ref_out, atol=1e-4), "f32 output mismatch vs reference"
    assert jnp.allclose(hid_f32, ref_hid, atol=1e-4), "f32 hidden mismatch vs reference"

    # Fast path: bf16 MXU operands (v6e/v7x-native), gate math still f32.
    prep_bf16 = prepare_params(params, mxu_dtype=jnp.bfloat16)
    out_bf16, hid_bf16 = encoder_rnn_encode(tokens, hidden0, prep_bf16)
    jax.block_until_ready((out_bf16, hid_bf16))
    assert jnp.allclose(out_bf16, ref_out, atol=5e-2), "bf16 output drifted from reference"
    assert jnp.allclose(hid_bf16, ref_hid, atol=5e-2), "bf16 hidden drifted from reference"

    # Single-step interface identical to EncoderRNN.forward(input, hidden).
    out1, hid1 = encoder_rnn_forward(tokens[:1], hidden0, prep_f32)
    ref1_out, ref1_hid = reference_encode(tokens[:1], hidden0, params)
    jax.block_until_ready((out1, hid1))
    assert out1.shape == (1, 1, HIDDEN) and hid1.shape == (1, 1, HIDDEN)
    assert jnp.allclose(out1, ref1_out, atol=1e-4), "single-step output mismatch"
    assert jnp.allclose(hid1, ref1_hid, atol=1e-4), "single-step hidden mismatch"

    print("KERNEL_OK")
</pallas_src>

<mosaic_0001>
module attributes {stable_mosaic.version = 11 : i64} {
  func.func @input_proj_kernel(%arg0: i32, %arg1: memref<8xi32, #tpu.memory_space<smem>>, %arg2: memref<1x1x32xf32, #tpu.memory_space<vmem>>, %arg3: memref<32x96xf32, #tpu.memory_space<vmem>>, %arg4: memref<1x96xf32, #tpu.memory_space<vmem>>, %arg5: memref<1x1x96xf32, #tpu.memory_space<vmem>>) attributes {dimension_semantics = [#tpu.dimension_semantics<parallel>], iteration_bounds = array<i64: 8>, scalar_prefetch = 1 : i64, scratch_operands = 0 : i64, tpu.core_type = #tpu.core_type<tc>, window_params = [{transform_indices = @transform_0, window_bounds = array<i64: 1, 1, 32>}, {pipeline_mode = #tpu.pipeline_mode<synchronous>, transform_indices = @transform_1, window_bounds = array<i64: 32, 96>}, {pipeline_mode = #tpu.pipeline_mode<synchronous>, transform_indices = @transform_2, window_bounds = array<i64: 1, 96>}, {transform_indices = @transform_3, window_bounds = array<i64: 1, 1, 96>}]} {
    %c0 = arith.constant 0 : index
    %c0_0 = arith.constant 0 : index
    %c0_1 = arith.constant 0 : index
    %0 = vector.load %arg2[%c0, %c0_0, %c0_1] : memref<1x1x32xf32, #tpu.memory_space<vmem>>, vector<1x1x32xf32>
    %1 = vector.shape_cast %0 : vector<1x1x32xf32> to vector<1x32xf32>
    %c0_2 = arith.constant 0 : index
    %c0_3 = arith.constant 0 : index
    %2 = vector.load %arg3[%c0_2, %c0_3] : memref<32x96xf32, #tpu.memory_space<vmem>>, vector<32x96xf32>
    %cst = arith.constant dense<0.000000e+00> : vector<1x96xf32>
    %3 = tpu.matmul %1, %2, %cst {dimension_numbers = #tpu.dot_dimension_numbers<[1], [0], [0], [1], [0, 0, 1, 1], [], []>} : vector<1x32xf32>, vector<32x96xf32>, vector<1x96xf32> -> vector<1x96xf32>
    %c0_4 = arith.constant 0 : index
    %c0_5 = arith.constant 0 : index
    %4 = vector.load %arg4[%c0_4, %c0_5] : memref<1x96xf32, #tpu.memory_space<vmem>>, vector<1x96xf32>
    %5 = arith.addf %3, %4 : vector<1x96xf32>
    %c0_6 = arith.constant 0 : index
    %c0_7 = arith.constant 0 : index
    %c0_8 = arith.constant 0 : index
    %6 = vector.load %arg5[%c0_6, %c0_7, %c0_8] : memref<1x1x96xf32, #tpu.memory_space<vmem>>, vector<1x1x96xf32>
    %7 = vector.shape_cast %6 : vector<1x1x96xf32> to vector<1x96xf32>
    %8 = vector.shape_cast %5 : vector<1x96xf32> to vector<1x1x96xf32>
    tpu.vector_store %arg5[%c0_6, %c0_7, %c0_8], %8 {strides = array<i32>} : memref<1x1x96xf32, #tpu.memory_space<vmem>>, vector<1x1x96xf32>,
    return
  }
  func.func @transform_0(%arg0: i32, %arg1: memref<8xi32, #tpu.memory_space<smem>>) -> (i32, i32, i32) {
    %0 = arith.index_cast %arg0 : i32 to index
    %1 = memref.load %arg1[%0] : memref<8xi32, #tpu.memory_space<smem>>
    %c0_i32 = arith.constant 0 : i32
    %c0_i32_0 = arith.constant 0 : i32
    %c0_i32_1 = arith.constant 0 : i32
    return %1, %c0_i32, %c0_i32_0 : i32, i32, i32
  }
  func.func @transform_1(%arg0: i32, %arg1: memref<8xi32, #tpu.memory_space<smem>>) -> (i32, i32) {
    %c0_i32 = arith.constant 0 : i32
    %c0_i32_0 = arith.constant 0 : i32
    %c0_i32_1 = arith.constant 0 : i32
    return %c0_i32, %c0_i32_0 : i32, i32
  }
  func.func @transform_2(%arg0: i32, %arg1: memref<8xi32, #tpu.memory_space<smem>>) -> (i32, i32) {
    %c0_i32 = arith.constant 0 : i32
    %c0_i32_0 = arith.constant 0 : i32
    %c0_i32_1 = arith.constant 0 : i32
    return %c0_i32, %c0_i32_0 : i32, i32
  }
  func.func @transform_3(%arg0: i32, %arg1: memref<8xi32, #tpu.memory_space<smem>>) -> (i32, i32, i32) {
    %c0_i32 = arith.constant 0 : i32
    %c0_i32_0 = arith.constant 0 : i32
    %c0_i32_1 = arith.constant 0 : i32
    return %arg0, %c0_i32, %c0_i32_0 : i32, i32, i32
  }
}

</mosaic_0001>

<llo_original>
// kernel: tpu_custom_call.1
$region0: #{tpu_custom_call.1}
  #allocation0 [shape = 'u32[]', space=smem, size = 0x4, offset = 0x4, fixed_abs, tag = 'smem constant byte address 0x4 - core index']
  #allocation1 [shape = 'u32[144,128]{1,0:T(1,128)}', space=vmem, size = 0x12000, scoped, tag = 'internal scratch']
  #allocation2 [shape = 's32[1]{0}', space=sflag, size = 0x4, scoped, tag = 'scoped memory for tpu_custom_call.1']
  #allocation3 [shape = 'u8[512]{0}', space=smem, size = 0x200, scoped, tag = 'prefetched SMEM operand 0']
  %s0 = inlined_call_operand.hbm [shape: s32[8], index: 0, kind: input, shape index: {}]
  %s1 = inlined_call_operand.hbm [shape: f32[16,1,32], index: 1, kind: input, shape index: {}]
  %s2 = inlined_call_operand.hbm [shape: f32[32,96], index: 2, kind: input, shape index: {}]
  %s3 = inlined_call_operand.vmem [shape: f32[1,96], index: 3, kind: input, shape index: {}]
  %s4 = inlined_call_operand.hbm [shape: f32[8,1,96], index: 4, kind: output, shape index: {}]
  %s5 = sld [smem:[#allocation0]]
  $region53: #{tpu_custom_call.1} parent=0
    _
  %s7 = ssub.s32 1, %s5
  %s8 = scalar_select 0, %s7, %s5
  %10 = dma.hbm_to_smem %s0, 16, [#allocation3], [#allocation2]
  %11 = dma.done [#allocation2], 16
  %12 = sfence
  $region1: #{tpu_custom_call.1} parent=0
    #allocation4 [shape = 'u8[1024]{0}', space=vmem, size = 0x400, scoped, tag = 'input window, operand 1']
    #allocation5 [shape = 's32[2]{0}', space=sflag, size = 0x8, scoped, tag = 'scoped memory for tpu_custom_call.1']
    #allocation6 [shape = 's32[2]{0}', space=sflag, size = 0x8, scoped, tag = 'scoped memory for tpu_custom_call.1']
    #allocation7 [shape = 'u8[16384]{0}', space=vmem, size = 0x4000, scoped, tag = 'input window, operand 2, single buffered']
    #allocation8 [shape = 's32[1]{0}', space=sflag, size = 0x4, scoped, tag = 'scoped memory for tpu_custom_call.1']
    #allocation9 [shape = 'u8[1024]{0}', space=vmem, size = 0x400, scoped, tag = 'output window, operand 0']
    %13 = vsyncpa [#allocation5], 0
    %s14 = scalar_lea.sflag [#allocation5], 1
    %15 = vsyncpa %s14, 0
    %16 = vsyncpa [#allocation8], 0
    %17 = vsyncpa [#allocation6], 0
    %s18 = scalar_lea.sflag [#allocation6], 1
    %19 = vsyncpa %s18, 0
    loop: start=0, step=1, limit=10
    $region2: #{tpu_custom_call.1} parent=1 // loop_pre_header
      _
    $region3: #{tpu_custom_call.1} parent=1 // loop_header
      %s21 = sphi 0, %s25
      %p22 = scmp.ge.s32.totalorder %s21, 10
      %s33 = sphi 0, %s35
      %s36 = sphi 0, %s33
      %s37 = sphi 0, %s36
      %s53 = sphi 0, %s37
      %s57 = sphi 0, %s57
      %s59 = sphi 0, %s57
      %s60 = sphi 0, %s59
      %s74 = sphi 0, %s60
      %s78 = sphi 0, %s78
      %s80 = sphi 0, %s78
      %s81 = sphi 0, %s80
      %s95 = sphi 0, %s81
      %s101 = sphi 0, %s103
      %s104 = sphi 0, %s101
      %s105 = sphi 0, %s104
      %s121 = sphi 0, %s105
    $region4: #{tpu_custom_call.1} parent=1 // loop_header_branch
      %24 = sbr.rel (%p22) target = $region8
    $region5: #{tpu_custom_call.1} parent=1 // loop_body
      %s26 = ssub.s32 %s21, 1
      %s27 = ssub.s32 %s21, 2
      %s28 = sadd.s32 %s21, 1
      %s29 = sld [smem:[#allocation3 + %s21]]
      %s30 = sld [smem:[#allocation3 + %s28]]
      %s31 = ssub.s32 %s29, %s30
      %p32 = scmp.eq.s32.totalorder %s31, 0
      %s34 = sadd.s32 %s33, 1
      %s35 = scalar_select %p32, %s33, %s34
      %p38 = pneg %p32
      %p39 = scmp.eq.s32.totalorder %s21, 7
      %p40 = por %p38, %p39
      %p41 = scmp.ne.s32.totalorder %s33, %s36
      %p42 = scmp.eq.s32.totalorder %s21, 0
      %p43 = por %p41, %p42
      %p44 = scmp.ne.s32.totalorder %s33, %s36
      %p45 = scmp.eq.s32.totalorder %s26, 7
      %p46 = por %p44, %p45
      %p47 = scmp.ne.s32.totalorder %s36, %s37
      %p48 = scmp.eq.s32.totalorder %s26, 0
      %p49 = por %p47, %p48
      %p50 = scmp.ne.s32.totalorder %s36, %s37
      %p51 = scmp.eq.s32.totalorder %s27, 7
      %p52 = por %p50, %p51
      %p54 = scmp.ne.s32.totalorder %s37, %s53
      %p55 = scmp.eq.s32.totalorder %s27, 0
      %p56 = por %p54, %p55
      %s58 = sadd.s32 %s57, 1
      %p61 = scmp.eq.s32.totalorder %s21, 7
      %p62 = scmp.ne.s32.totalorder %s57, %s59
      %p63 = scmp.eq.s32.totalorder %s21, 0
      %p64 = por %p62, %p63
      %p65 = scmp.ne.s32.totalorder %s57, %s59
      %p66 = scmp.eq.s32.totalorder %s26, 7
      %p67 = por %p65, %p66
      %p68 = scmp.ne.s32.totalorder %s59, %s60
      %p69 = scmp.eq.s32.totalorder %s26, 0
      %p70 = por %p68, %p69
      %p71 = scmp.ne.s32.totalorder %s59, %s60
      %p72 = scmp.eq.s32.totalorder %s27, 7
      %p73 = por %p71, %p72
      %p75 = scmp.ne.s32.totalorder %s60, %s74
      %p76 = scmp.eq.s32.totalorder %s27, 0
      %p77 = por %p75, %p76
      %s79 = sadd.s32 %s78, 1
      %p82 = scmp.eq.s32.totalorder %s21, 7
      %p83 = scmp.ne.s32.totalorder %s78, %s80
      %p84 = scmp.eq.s32.totalorder %s21, 0
      %p85 = por %p83, %p84
      %p86 = scmp.ne.s32.totalorder %s78, %s80
      %p87 = scmp.eq.s32.totalorder %s26, 7
      %p88 = por %p86, %p87
      %p89 = scmp.ne.s32.totalorder %s80, %s81
      %p90 = scmp.eq.s32.totalorder %s26, 0
      %p91 = por %p89, %p90
      %p92 = scmp.ne.s32.totalorder %s80, %s81
      %p93 = scmp.eq.s32.totalorder %s27, 7
      %p94 = por %p92, %p93
      %p96 = scmp.ne.s32.totalorder %s81, %s95
      %p97 = scmp.eq.s32.totalorder %s27, 0
      %p98 = por %p96, %p97
      %s99 = ssub.s32 %s21, %s28
      %p100 = scmp.eq.s32.totalorder %s99, 0
      %s102 = sadd.s32 %s101, 1
      %s103 = scalar_select %p100, %s101, %s102
      %p106 = pneg %p100
      %p107 = scmp.eq.s32.totalorder %s21, 7
      %p108 = por %p106, %p107
      %p109 = scmp.ne.s32.totalorder %s101, %s104
      %p110 = scmp.eq.s32.totalorder %s21, 0
      %p111 = por %p109, %p110
      %p112 = scmp.ne.s32.totalorder %s101, %s104
      %p113 = scmp.eq.s32.totalorder %s26, 7
      %p114 = por %p112, %p113
      %p115 = scmp.ne.s32.totalorder %s104, %s105
      %p116 = scmp.eq.s32.totalorder %s26, 0
      %p117 = por %p115, %p116
      %p118 = scmp.ne.s32.totalorder %s104, %s105
      %p119 = scmp.eq.s32.totalorder %s27, 7
      %p120 = por %p118, %p119
      %p122 = scmp.ne.s32.totalorder %s105, %s121
      %p123 = scmp.eq.s32.totalorder %s27, 0
      %p124 = por %p122, %p123
      %p125 = scmp.le.s32.totalorder 1, %s21
      %p126 = scmp.lt.s32.totalorder %s21, 9
      %p127 = pnand %p125, %p126
      %p128 = pneg %p127
      // Predicated region
      $region9: #{tpu_custom_call.1} parent=5 // pred_check
        _
      $region10: #{tpu_custom_call.1} parent=5 // pred_check_branch
        %130 = sbr.rel (%p127) target = $region12
      $region11: #{tpu_custom_call.1} parent=5 // pred_region
        %s131 = ssub.s32 %s21, 1
        // Predicated region
        $region13: #{tpu_custom_call.1} parent=11 // pred_check
          %p132 = pneg %p70
        $region14: #{tpu_custom_call.1} parent=11 // pred_check_branch
          %134 = sbr.rel (%p132) target = $region16
        $region15: #{tpu_custom_call.1} parent=11 // pred_region
          %s136 = ssub.s32 512, 512
          %137 = vsyncadd [#allocation8], %s136
          %s138 = sshll.u32 [#allocation7], 4
          %s139 = int_to_ptr.vmem [resolvable:$true] %s138
          %144 = dma.hbm_to_vmem [thread:$0]  %s2, 512, %s139, [#allocation8], 128, 128, 8
        $region16: #{tpu_custom_call.1} parent=11 // pred_fallthru
          _
        // Predicated region
        $region17: #{tpu_custom_call.1} parent=11 // pred_check
          %p145 = pneg %p91
        $region18: #{tpu_custom_call.1} parent=11 // pred_check_branch
          %147 = sbr.rel (%p145) target = $region20
        $region19: #{tpu_custom_call.1} parent=11 // pred_region
          _
        $region20: #{tpu_custom_call.1} parent=11 // pred_fallthru
          _
      $region12: #{tpu_custom_call.1} parent=5 // pred_fallthru
        _
      %p148 = scmp.lt.s32.totalorder %s21, 8
      // Predicated region
      $region21: #{tpu_custom_call.1} parent=5 // pred_check
        %p149 = pneg %p148
      $region22: #{tpu_custom_call.1} parent=5 // pred_check_branch
        %151 = sbr.rel (%p149) target = $region24
      $region23: #{tpu_custom_call.1} parent=5 // pred_region
        // Predicated region
        $region25: #{tpu_custom_call.1} parent=23 // pred_check
          %p152 = pneg %p43
        $region26: #{tpu_custom_call.1} parent=23 // pred_check_branch
          %154 = sbr.rel (%p152) target = $region28
        $region27: #{tpu_custom_call.1} parent=23 // pred_region
          %s155 = sand.u32 %s33, 1
          %s156 = scalar_lea.sflag [#allocation5], %s155
          %s157 = sand.u32 %s33, 1
          %s158 = scalar_lea.vmem [#allocation4], %s157
          %s159 = sld [smem:[#allocation3 + %s21]]
          %s161 = ssub.s32 16, 16
          %162 = vsyncadd %s156, %s161
          %s163 = smul.addr %s159, 16
          %s164 = scalar_lea.hbm %s1, %s163
          %s166 = sshll.u32 %s158, 4
          %s167 = int_to_ptr.vmem [resolvable:$true] %s166
          %169 = dma.hbm_to_vmem [thread:$0]  %s164, 16, %s167, %s156
        $region28: #{tpu_custom_call.1} parent=23 // pred_fallthru
          _
      $region24: #{tpu_custom_call.1} parent=5 // pred_fallthru
        _
      %p170 = scmp.le.s32.totalorder 1, %s21
      %p171 = scmp.lt.s32.totalorder %s21, 9
      %p172 = pnand %p170, %p171
      %p173 = pneg %p172
      // Predicated region
      $region29: #{tpu_custom_call.1} parent=5 // pred_check
        _
      $region30: #{tpu_custom_call.1} parent=5 // pred_check_branch
        %175 = sbr.rel (%p172) target = $region32
      $region31: #{tpu_custom_call.1} parent=5 // pred_region
        %s176 = ssub.s32 %s21, 1
        %s177 = sand.u32 %s36, 1
        %s178 = scalar_lea.sflag [#allocation5], %s177
        %s179 = sand.u32 %s36, 1
        %s180 = scalar_lea.vmem [#allocation4], %s179
        // Predicated region
        $region33: #{tpu_custom_call.1} parent=31 // pred_check
          %p181 = pneg %p49
        $region34: #{tpu_custom_call.1} parent=31 // pred_check_branch
          %183 = sbr.rel (%p181) target = $region36
        $region35: #{tpu_custom_call.1} parent=31 // pred_region
          %184 = dma.done %s178, 16
        $region36: #{tpu_custom_call.1} parent=31 // pred_fallthru
          _
        // Predicated region
        $region37: #{tpu_custom_call.1} parent=31 // pred_check
          %p185 = pneg %p70
        $region38: #{tpu_custom_call.1} parent=31 // pred_check_branch
          %187 = sbr.rel (%p185) target = $region40
        $region39: #{tpu_custom_call.1} parent=31 // pred_region
          %188 = dma.done [#allocation8], 512
        $region40: #{tpu_custom_call.1} parent=31 // pred_fallthru
          _
        %s189 = sand.u32 %s36, 1
        %s190 = scalar_lea.sflag [#allocation5], %s189
        %s191 = sand.u32 %s36, 1
        %s192 = scalar_lea.vmem [#allocation4], %s191
        %p193 = pneg %p49
        %p194 = pneg %p46
        %p195 = pneg %p70
        %p196 = pneg %p67
        %p197 = pneg %p91
        %p198 = pneg %p88
        %p199 = pneg %p117
        %p200 = pneg %p114
        %s201 = sand.u32 %s104, 1
        %s202 = scalar_lea.sflag [#allocation6], %s201
        %s203 = sand.u32 %s104, 1
        %s204 = scalar_lea.vmem [#allocation9], %s203
        %s205 = sld [smem:[#allocation3 + %s26]]
        %v206 = vld [vmem:[%s180] sm:$0x1]
        %v207 = vld [vmem:[#allocation7] sm:$0xff]
        %v208 = vld [vmem:[#allocation7 + $0x8] sm:$0xff]
        %v209 = vld [vmem:[#allocation7 + $0x10] sm:$0xff]
        %v210 = vld [vmem:[#allocation7 + $0x18] sm:$0xff]
        %v211 = vld [vmem:[%s3] sm:$0x1]
        %vm212 = vcmask 261120
        %v214 = vsel %vm212, %v206, 0
        %216 = vmatprep.subr.mxu0 0.0
        %217 = vmatpush1.msra.mxu0 %v207
        %218 = vmatprep.subr.mxu0 0.0
        %219 = vmatpush1.msra.mxu0 %v208
        %220 = vmatprep.subr.mxu0 0.0
        %221 = vmatpush1.msra.mxu0 %v209
        %222 = vmatprep.subr.mxu0 0.0
        %223 = vmatpush1.msra.mxu0 %v210
        %224 = vmatprep.subr.mxu0 0.0
        %225 = vmatpush1.msra.mxu0 0.0
        %226 = vmatprep.subr.mxu0 0.0
        %227 = vmatpush1.msra.mxu0 0.0
        %228 = vmatprep.subr.mxu0 0.0
        %229 = vmatpush1.msra.mxu0 0.0
        %230 = vmatprep.subr.mxu0 0.0
        %231 = vmatpush1.msra.mxu0 0.0
        %232 = vmatprep.subr.mxu0 0.0
        %233 = vmatpush1.msra.mxu0 0.0
        %234 = vmatprep.subr.mxu0 0.0
        %235 = vmatpush1.msra.mxu0 0.0
        %236 = vmatprep.subr.mxu0 0.0
        %237 = vmatpush1.msra.mxu0 0.0
        %238 = vmatprep.subr.mxu0 0.0
        %239 = vmatpush1.msra.mxu0 0.0
        %240 = vmatprep.subr.mxu0 0.0
        %241 = vmatpush1.msra.mxu0 0.0
        %242 = vmatprep.subr.mxu0 0.0
        %243 = vmatpush1.msra.mxu0 0.0
        %244 = vmatprep.subr.mxu0 0.0
        %245 = vmatpush1.msra.mxu0 0.0
        %246 = vmatprep.subr.mxu0 0.0
        %247 = vmatpush1.msra.mxu0 0.0
        %248 = vmatprep.subr.mxu0 0.0
        %249 = vmatpush1.msra.mxu0 0.0
        %250 = vmatprep.subr.mxu0 0.0
        %251 = vmatpush1.msra.mxu0 0.0
        %252 = vmatprep.subr.mxu0 0.0
        %253 = vmatpush1.msra.mxu0 0.0
        %254 = vmatprep.subr.mxu0 0.0
        %255 = vmatpush1.msra.mxu0 0.0
        %256 = vmatprep.subr.mxu0 0.0
        %257 = vmatpush1.msra.mxu0 0.0
        %258 = vmatprep.subr.mxu0 0.0
        %259 = vmatpush1.msra.mxu0 0.0
        %260 = vmatprep.subr.mxu0 0.0
        %261 = vmatpush1.msra.mxu0 0.0
        %262 = vmatprep.subr.mxu0 0.0
        %263 = vmatpush1.msra.mxu0 0.0
        %264 = vmatprep.subr.mxu0 0.0
        %265 = vmatpush1.msra.mxu0 0.0
        %266 = vmatprep.subr.mxu0 0.0
        %267 = vmatpush1.msra.mxu0 0.0
        %268 = vmatprep.subr.mxu0 0.0
        %269 = vmatpush1.msra.mxu0 0.0
        %270 = vmatprep.subr.mxu0 0.0
        %271 = vmatpush1.msra.mxu0 0.0
        %272 = vmatprep.subr.mxu0 0.0
        %273 = vmatpush1.msra.mxu0 0.0
        %274 = vmatprep.subr.mxu0 0.0
        %275 = vmatpush1.msra.mxu0 0.0
        %276 = vmatprep.subr.mxu0 0.0
        %277 = vmatpush1.msra.mxu0 0.0
        %278 = vmatprep.subr.mxu0 0.0
        %279 = vmatpush1.msra.mxu0 0.0
        %280 = vmatprep.mubr.f32.mxu0 0.0
        %281 = vmatmul.mubr.f32.gmra.mrb[0].mxu0 %v214
        %v282 = vpop.f32.mrb[0].mxu0
        %v283 = vadd.f32 %v211, %v282
        %v284 = vpop.f32.mrb[0].mxu0
        %285 = vdwg.mxu0
        %vm286 = vcmask 778240
        %287 = vst.msk [vmem:[%s204] sm:$0x1] %vm286, %v283
        %s288 = sand.u32 %s104, 1
        %s289 = scalar_lea.sflag [#allocation6], %s288
        %s290 = sand.u32 %s104, 1
        %s291 = scalar_lea.vmem [#allocation9], %s290
        // Predicated region
        $region41: #{tpu_custom_call.1} parent=31 // pred_check
          %p292 = pneg %p114
        $region42: #{tpu_custom_call.1} parent=31 // pred_check_branch
          %294 = sbr.rel (%p292) target = $region44
        $region43: #{tpu_custom_call.1} parent=31 // pred_region
          %s296 = ssub.s32 16, 16
          %297 = vsyncadd %s289, %s296
          %s298 = smul.addr %s26, 16
          %s299 = scalar_lea.hbm %s4, %s298
          %s301 = sshll.u32 %s291, 4
          %s302 = int_to_ptr.vmem [resolvable:$true] %s301
          %304 = dma.vmem_to_hbm [thread:$0]  %s302, 16, %s299, %s289
        $region44: #{tpu_custom_call.1} parent=31 // pred_fallthru
          _
      $region32: #{tpu_custom_call.1} parent=5 // pred_fallthru
        _
      %p305 = scmp.le.s32.totalorder 2, %s21
      // Predicated region
      $region45: #{tpu_custom_call.1} parent=5 // pred_check
        %p306 = pneg %p305
      $region46: #{tpu_custom_call.1} parent=5 // pred_check_branch
        %308 = sbr.rel (%p306) target = $region48
      $region47: #{tpu_custom_call.1} parent=5 // pred_region
        %s309 = ssub.s32 %s21, 2
        // Predicated region
        $region49: #{tpu_custom_call.1} parent=47 // pred_check
          %p310 = pneg %p120
        $region50: #{tpu_custom_call.1} parent=47 // pred_check_branch
          %312 = sbr.rel (%p310) target = $region52
        $region51: #{tpu_custom_call.1} parent=47 // pred_region
          %s313 = sand.u32 %s105, 1
          %s314 = scalar_lea.sflag [#allocation6], %s313
          %s315 = sand.u32 %s105, 1
          %s316 = scalar_lea.vmem [#allocation9], %s315
          %317 = dma.done %s314, 16
        $region52: #{tpu_custom_call.1} parent=47 // pred_fallthru
          _
      $region48: #{tpu_custom_call.1} parent=5 // pred_fallthru
        _
    $region6: #{tpu_custom_call.1} parent=1 // loop_footer
      %s25 = sadd.s32 1, %s21
    $region7: #{tpu_custom_call.1} parent=1 // loop_footer_branch
      %20 = sbr.rel target = $region3
    $region8: #{tpu_custom_call.1} parent=1 // loop_exit
      _
    %318 = vsyncpa [#allocation5], 1
    %s319 = scalar_lea.sflag [#allocation5], 1
    %320 = vsyncpa %s319, 1
    %321 = vsyncpa [#allocation8], 1
    %322 = vsyncpa [#allocation6], 1
    %s323 = scalar_lea.sflag [#allocation6], 1
    %324 = vsyncpa %s323, 1

</llo_original>
